<compile_context>
chip_gen: v7x
topology: tpu7x:2x2x1
jax: 0.10.0
libtpu: 0.0.40
codegen_flags: <defaults>
</compile_context>

<pallas_src>
import functools

import jax
import jax.numpy as jnp
from jax.experimental import pallas as pl
from jax.experimental.pallas import tpu as pltpu


# --------------------------------------------------------------------------- #
# Kernel
# --------------------------------------------------------------------------- #
def classifier_kernel(patches_ref, conv_w_ref, conv_b_ref, head_w_ref,
                      head_b_ref, onehot_ref, pred_ref, loss_ref, feat_acc,
                      *, inv_hw, inv_n):
    n_idx = pl.program_id(0)          # batch sample
    s_idx = pl.program_id(1)          # spatial tile within the sample

    # ---- init accumulator once -------------------------------------------
    @pl.when(jnp.logical_and(n_idx == 0, s_idx == 0))
    def _init():
        feat_acc[...] = jnp.zeros_like(feat_acc)

    # ---- backbone: 3x3 conv as (TS, K) @ (K, F) on the MXU, bias + ReLU ----
    x = patches_ref[0]                                            # (TS, KP) bf16
    h = jnp.dot(x, conv_w_ref[...],
                preferred_element_type=jnp.float32)               # (TS, FP) f32
    h = jnp.maximum(h + conv_b_ref[...], 0.0)

    # ---- neck: global average pool (in-kernel reduction, no pool matmul) ---
    partial = jnp.sum(h, axis=0, keepdims=True) * inv_hw          # (1, FP)
    rows = jax.lax.broadcasted_iota(jnp.int32, feat_acc.shape, 0)
    feat_acc[...] = feat_acc[...] + jnp.where(rows == n_idx, partial, 0.0)

    # ---- head + softmax + mean-CE, only on the very last grid step ---------
    last = jnp.logical_and(n_idx == pl.num_programs(0) - 1,
                           s_idx == pl.num_programs(1) - 1)

    @pl.when(last)
    def _epilogue():
        feat = feat_acc[...]                                      # (NP, FP) f32
        logits = jnp.dot(feat, head_w_ref[...],
                         preferred_element_type=jnp.float32) + head_b_ref[...]
        # padded class columns carry a -1e30 bias -> exp underflows to 0,
        # so softmax / CE only see the real classes.
        m = jnp.max(logits, axis=-1, keepdims=True)
        e = jnp.exp(logits - m)
        denom = jnp.sum(e, axis=-1, keepdims=True)
        pred_ref[...] = e * pl.reciprocal(denom, approx=True)     # (NP, CP)

        log_probs = (logits - m) - jnp.log(denom)
        nll = -jnp.sum(onehot_ref[...] * log_probs, axis=-1, keepdims=True)
        loss = jnp.sum(nll) * inv_n        # padded rows have zero one-hot
        loss_ref[...] = jnp.full(loss_ref.shape, loss, dtype=loss_ref.dtype)


# --------------------------------------------------------------------------- #
# Plain-JAX glue
# --------------------------------------------------------------------------- #
def _round_up(x, m):
    return ((x + m - 1) // m) * m


def _pad_to(x, shape):
    pads = [(0, t - s) for s, t in zip(x.shape, shape)]
    return jnp.pad(x, pads)


def _im2col_nchw(x, kh=3, kw=3):
    """(N, C, H, W) -> (N*H*W, C*kh*kw) with 'same' padding, rows ordered (n,h,w)."""
    n, c, h, w = x.shape
    xp = jnp.pad(x, ((0, 0), (0, 0), (1, 1), (1, 1)))
    cols = [xp[:, :, i:i + h, j:j + w] for i in range(kh) for j in range(kw)]
    patches = jnp.stack(cols, axis=2)                      # (N, C, kh*kw, H, W)
    patches = patches.transpose(0, 3, 4, 1, 2).reshape(n * h * w, c * kh * kw)
    return patches
# TODO(synk): on v5e the 9x im2col HBM inflation should be replaced by
# in-kernel shifted accumulation over the raw NCHW tile (pltpu.roll / slices).


def classifier_forward_test(img, label, params, num_classes, *, spatial_tile=128):
    """Mirrors Classifier.forward(batch_data, istrain=False): returns (pred, loss)."""
    n, c_in, h, w = img.shape
    conv_w, conv_b, head_w, head_b = params
    k = conv_w.shape[0]                      # C_in * 9
    c_feat = conv_w.shape[1]
    hw = h * w

    # spatial tile (rows of the patch matrix per grid step); sized so double-
    # buffered bf16 tiles stay tiny even under v7x's 64 MiB VMEM.
    ts = spatial_tile if (spatial_tile is not None and hw % spatial_tile == 0) else hw

    # lane-dense padded dims (MXU / vst friendly)
    KP = _round_up(max(k, 128), 128)
    FP = _round_up(max(c_feat, 128), 128)
    CP = _round_up(max(num_classes, 128), 128)
    NP = _round_up(max(n, 8), 8)

    # ---- host-side prep: im2col + padding + bf16 casts ----------------------
    patches = _im2col_nchw(img)                                     # (N*HW, K) f32
    patches = _pad_to(patches, (n * hw, KP)).reshape(n, hw, KP)
    patches = patches.astype(jnp.bfloat16)

    conv_w_p = _pad_to(conv_w, (KP, FP)).astype(jnp.bfloat16)
    conv_b_p = _pad_to(conv_b.reshape(1, -1), (1, FP)).astype(jnp.float32)
    head_w_p = _pad_to(head_w, (FP, CP)).astype(jnp.float32)
    head_b_p = _pad_to(head_b.reshape(1, -1), (1, CP)).astype(jnp.float32)
    col = jnp.arange(CP)
    head_b_p = jnp.where(col[None, :] < num_classes, head_b_p, -1e30)
    head_b_p = head_b_p.astype(jnp.float32)

    onehot = jax.nn.one_hot(label, CP, dtype=jnp.float32)           # (N, CP)
    onehot = _pad_to(onehot, (NP, CP))

    grid = (n, hw // ts)

    kernel = functools.partial(classifier_kernel,
                               inv_hw=1.0 / float(hw),
                               inv_n=1.0 / float(n))

    flops = 2 * n * hw * KP * FP + 2 * NP * FP * CP
    bytes_accessed = (patches.size * 2 + conv_w_p.size * 2
                      + (conv_b_p.size + head_w_p.size + head_b_p.size
                         + onehot.size + NP * CP + 8 * 128) * 4)

    pred_p, loss_p = pl.pallas_call(
        kernel,
        out_shape=(
            jax.ShapeDtypeStruct((NP, CP), jnp.float32),
            jax.ShapeDtypeStruct((8, 128), jnp.float32),
        ),
        grid_spec=pltpu.PrefetchScalarGridSpec(
            num_scalar_prefetch=0,
            grid=grid,
            in_specs=[
                pl.BlockSpec((1, ts, KP), lambda ni, si: (ni, si, 0)),   # patches
                pl.BlockSpec((KP, FP), lambda ni, si: (0, 0)),           # conv_w
                pl.BlockSpec((1, FP), lambda ni, si: (0, 0)),            # conv_b
                pl.BlockSpec((FP, CP), lambda ni, si: (0, 0)),           # head_w
                pl.BlockSpec((1, CP), lambda ni, si: (0, 0)),            # head_b
                pl.BlockSpec((NP, CP), lambda ni, si: (0, 0)),           # onehot
            ],
            out_specs=(
                pl.BlockSpec((NP, CP), lambda ni, si: (0, 0)),           # pred
                pl.BlockSpec((8, 128), lambda ni, si: (0, 0)),           # loss
            ),
            scratch_shapes=[pltpu.VMEM((NP, FP), jnp.float32)],          # GAP acc
        ),
        compiler_params=pltpu.CompilerParams(
            # Both axes are reduction-like: the last grid step reads the full
            # cross-batch accumulator, so neither may be megacore-parallel.
            # TODO(synk): v7x 2-TC split would need per-core partial feats +
            # a second reduction pass.
            dimension_semantics=("arbitrary", "arbitrary"),
            vmem_limit_bytes=32 * 1024 * 1024,
        ),
        cost_estimate=pl.CostEstimate(
            flops=int(flops),
            transcendentals=int(NP * CP + NP),
            bytes_accessed=int(bytes_accessed),
        ),
    )(patches, conv_w_p, conv_b_p, head_w_p, head_b_p, onehot)

    pred = pred_p[:n, :num_classes]
    loss = loss_p[0, 0]
    return pred, loss


# --------------------------------------------------------------------------- #
# Pure-JAX reference (f32) for correctness checking
# --------------------------------------------------------------------------- #
def _reference_forward(img, label, params, num_classes):
    conv_w, conv_b, head_w, head_b = params
    n, c_in, h, w = img.shape
    c_feat = conv_w.shape[1]
    patches = _im2col_nchw(img)
    hmat = jnp.maximum(patches @ conv_w + conv_b[None, :], 0.0)
    feat = hmat.reshape(n, h * w, c_feat).mean(axis=1)
    logits = feat @ head_w + head_b[None, :]
    pred = jax.nn.softmax(logits, axis=-1)
    logp = jax.nn.log_softmax(logits, axis=-1)
    loss = -jnp.mean(logp[jnp.arange(n), label])
    return pred, loss


if __name__ == "__main__":
    # small, forward-consistent shapes
    N, C_in, H, W = 2, 4, 16, 16
    C_feat, NUM_CLASSES = 32, 10

    key = jax.random.PRNGKey(0)
    k_img, k_cw, k_hw, k_lbl = jax.random.split(key, 4)

    img = jax.random.normal(k_img, (N, C_in, H, W), dtype=jnp.float32)
    label = jax.random.randint(k_lbl, (N,), 0, NUM_CLASSES)

    # deterministic synthetic parameters (no checkpoint loading).
    # conv_w corresponds to a PyTorch Conv2d weight (C_feat, C_in, 3, 3)
    # reshaped to (C_in*9, C_feat).
    conv_w = jax.random.normal(k_cw, (C_in * 9, C_feat), dtype=jnp.float32) * 0.1
    conv_b = jnp.zeros((C_feat,), dtype=jnp.float32)
    head_w = jax.random.normal(k_hw, (C_feat, NUM_CLASSES), dtype=jnp.float32) * 0.1
    head_b = jnp.zeros((NUM_CLASSES,), dtype=jnp.float32)

    params = (conv_w, conv_b, head_w, head_b)

    pred, loss = classifier_forward_test(img, label, params, NUM_CLASSES,
                                         spatial_tile=128)
    jax.block_until_ready((pred, loss))

    pred_ref, loss_ref = _reference_forward(img, label, params, NUM_CLASSES)

    assert pred.shape == (N, NUM_CLASSES)
    # softmax rows sum to ~1 (approx reciprocal + bf16 matmul -> looser tol)
    assert jnp.allclose(jnp.sum(pred, axis=1), 1.0, atol=1e-2)
    assert jnp.allclose(pred, pred_ref, atol=3e-2), (pred, pred_ref)
    assert jnp.allclose(loss, loss_ref, atol=3e-2), (loss, loss_ref)

    # TODO(synk): pretrained-weight loading and the build_backbone/neck/head
    # registry dispatch have no Pallas equivalent; a fixed conv+GAP+linear
    # instantiation is used instead.
    print("KERNEL_OK")
</pallas_src>

<mosaic_0001>
module attributes {stable_mosaic.version = 11 : i64} {
  func.func @classifier_kernel(%arg0: i32, %arg1: i32, %arg2: memref<1x128x128xbf16, #tpu.memory_space<vmem>>, %arg3: memref<128x128xbf16, #tpu.memory_space<vmem>>, %arg4: memref<1x128xf32, #tpu.memory_space<vmem>>, %arg5: memref<128x128xf32, #tpu.memory_space<vmem>>, %arg6: memref<1x128xf32, #tpu.memory_space<vmem>>, %arg7: memref<8x128xf32, #tpu.memory_space<vmem>>, %arg8: memref<8x128xf32, #tpu.memory_space<vmem>>, %arg9: memref<8x128xf32, #tpu.memory_space<vmem>>, %arg10: memref<8x128xf32, #tpu.memory_space<vmem>>) attributes {dimension_semantics = [#tpu.dimension_semantics<arbitrary>, #tpu.dimension_semantics<arbitrary>], iteration_bounds = array<i64: 2, 2>, scalar_prefetch = 0 : i64, scratch_operands = 1 : i64, tpu.core_type = #tpu.core_type<tc>, window_params = [{transform_indices = @transform_0, window_bounds = array<i64: 1, 128, 128>}, {pipeline_mode = #tpu.pipeline_mode<synchronous>, transform_indices = @transform_1, window_bounds = array<i64: 128, 128>}, {pipeline_mode = #tpu.pipeline_mode<synchronous>, transform_indices = @transform_2, window_bounds = array<i64: 1, 128>}, {pipeline_mode = #tpu.pipeline_mode<synchronous>, transform_indices = @transform_3, window_bounds = array<i64: 128, 128>}, {pipeline_mode = #tpu.pipeline_mode<synchronous>, transform_indices = @transform_4, window_bounds = array<i64: 1, 128>}, {pipeline_mode = #tpu.pipeline_mode<synchronous>, transform_indices = @transform_5, window_bounds = array<i64: 8, 128>}, {pipeline_mode = #tpu.pipeline_mode<synchronous>, transform_indices = @transform_6, window_bounds = array<i64: 8, 128>}, {pipeline_mode = #tpu.pipeline_mode<synchronous>, transform_indices = @transform_7, window_bounds = array<i64: 8, 128>}]} {
    %c0_i32 = arith.constant 0 : i32
    %0 = arith.cmpi eq, %arg0, %c0_i32 : i32
    %c0_i32_0 = arith.constant 0 : i32
    %1 = arith.cmpi eq, %arg1, %c0_i32_0 : i32
    %2 = arith.andi %0, %1 : i1
    %3 = arith.extui %2 : i1 to i32
    %c0_i32_1 = arith.constant 0 : i32
    %4 = arith.cmpi ne, %3, %c0_i32_1 : i32
    scf.if %4 {
      %cst_18 = arith.constant 0.000000e+00 : f32
      %33 = vector.broadcast %cst_18 : f32 to vector<8x128xf32>
      %c0_19 = arith.constant 0 : index
      %c0_20 = arith.constant 0 : index
      %34 = vector.load %arg10[%c0_19, %c0_20] : memref<8x128xf32, #tpu.memory_space<vmem>>, vector<8x128xf32>
      tpu.vector_store %arg10[%c0_19, %c0_20], %33 {strides = array<i32>} : memref<8x128xf32, #tpu.memory_space<vmem>>, vector<8x128xf32>,
    } else {
    }
    %c0 = arith.constant 0 : index
    %c0_2 = arith.constant 0 : index
    %c0_3 = arith.constant 0 : index
    %5 = vector.load %arg2[%c0, %c0_2, %c0_3] : memref<1x128x128xbf16, #tpu.memory_space<vmem>>, vector<1x128x128xbf16>
    %6 = vector.shape_cast %5 : vector<1x128x128xbf16> to vector<128x128xbf16>
    %c0_4 = arith.constant 0 : index
    %c0_5 = arith.constant 0 : index
    %7 = vector.load %arg3[%c0_4, %c0_5] : memref<128x128xbf16, #tpu.memory_space<vmem>>, vector<128x128xbf16>
    %cst = arith.constant dense<0.000000e+00> : vector<128x128xf32>
    %8 = tpu.matmul %6, %7, %cst {dimension_numbers = #tpu.dot_dimension_numbers<[1], [0], [0], [1], [0, 0, 1, 1], [], []>} : vector<128x128xbf16>, vector<128x128xbf16>, vector<128x128xf32> -> vector<128x128xf32>
    %c0_6 = arith.constant 0 : index
    %c0_7 = arith.constant 0 : index
    %9 = vector.load %arg4[%c0_6, %c0_7] : memref<1x128xf32, #tpu.memory_space<vmem>>, vector<1x128xf32>
    %10 = vector.broadcast %9 : vector<1x128xf32> to vector<128x128xf32>
    %11 = arith.addf %8, %10 : vector<128x128xf32>
    %cst_8 = arith.constant 0.000000e+00 : f32
    %12 = vector.broadcast %cst_8 : f32 to vector<128x128xf32>
    %13 = arith.maximumf %11, %12 : vector<128x128xf32>
    %cst_9 = arith.constant dense<0.000000e+00> : vector<128xf32>
    %14 = vector.multi_reduction <add>, %13, %cst_9 [0] : vector<128x128xf32> to vector<128xf32>
    %15 = vector.shape_cast %14 : vector<128xf32> to vector<1x128xf32>
    %cst_10 = arith.constant 3.906250e-03 : f32
    %16 = vector.broadcast %cst_10 : f32 to vector<1x128xf32>
    %17 = arith.mulf %15, %16 : vector<1x128xf32>
    %18 = tpu.iota {dimensions = array<i32: 0>} : vector<8x128xi32>
    %c0_11 = arith.constant 0 : index
    %c0_12 = arith.constant 0 : index
    %19 = vector.load %arg10[%c0_11, %c0_12] : memref<8x128xf32, #tpu.memory_space<vmem>>, vector<8x128xf32>
    %20 = vector.broadcast %arg0 : i32 to vector<8x128xi32>
    %21 = arith.cmpi eq, %18, %20 : vector<8x128xi32>
    %cst_13 = arith.constant 0.000000e+00 : f32
    %22 = vector.shape_cast %17 : vector<1x128xf32> to vector<1x128xf32>
    %23 = vector.broadcast %22 : vector<1x128xf32> to vector<8x128xf32>
    %24 = vector.broadcast %cst_13 : f32 to vector<8x128xf32>
    %25 = arith.select %21, %23, %24 : vector<8x128xi1>, vector<8x128xf32>
    %26 = arith.addf %19, %25 : vector<8x128xf32>
    %c0_14 = arith.constant 0 : index
    %c0_15 = arith.constant 0 : index
    %27 = vector.load %arg10[%c0_14, %c0_15] : memref<8x128xf32, #tpu.memory_space<vmem>>, vector<8x128xf32>
    tpu.vector_store %arg10[%c0_14, %c0_15], %26 {strides = array<i32>} : memref<8x128xf32, #tpu.memory_space<vmem>>, vector<8x128xf32>,
    %c1_i32 = arith.constant 1 : i32
    %28 = arith.cmpi eq, %arg0, %c1_i32 : i32
    %c1_i32_16 = arith.constant 1 : i32
    %29 = arith.cmpi eq, %arg1, %c1_i32_16 : i32
    %30 = arith.andi %28, %29 : i1
    %31 = arith.extui %30 : i1 to i32
    %c0_i32_17 = arith.constant 0 : i32
    %32 = arith.cmpi ne, %31, %c0_i32_17 : i32
    scf.if %32 {
      %c0_18 = arith.constant 0 : index
      %c0_19 = arith.constant 0 : index
      %33 = vector.load %arg10[%c0_18, %c0_19] : memref<8x128xf32, #tpu.memory_space<vmem>>, vector<8x128xf32>
      %c0_20 = arith.constant 0 : index
      %c0_21 = arith.constant 0 : index
      %34 = vector.load %arg5[%c0_20, %c0_21] : memref<128x128xf32, #tpu.memory_space<vmem>>, vector<128x128xf32>
      %cst_22 = arith.constant dense<0.000000e+00> : vector<8x128xf32>
      %35 = tpu.matmul %33, %34, %cst_22 {dimension_numbers = #tpu.dot_dimension_numbers<[1], [0], [0], [1], [0, 0, 1, 1], [], []>} : vector<8x128xf32>, vector<128x128xf32>, vector<8x128xf32> -> vector<8x128xf32>
      %c0_23 = arith.constant 0 : index
      %c0_24 = arith.constant 0 : index
      %36 = vector.load %arg6[%c0_23, %c0_24] : memref<1x128xf32, #tpu.memory_space<vmem>>, vector<1x128xf32>
      %37 = vector.broadcast %36 : vector<1x128xf32> to vector<8x128xf32>
      %38 = arith.addf %35, %37 : vector<8x128xf32>
      %cst_25 = arith.constant dense<0xFF800000> : vector<8xf32>
      %39 = vector.multi_reduction <maximumf>, %38, %cst_25 [1] : vector<8x128xf32> to vector<8xf32>
      %40 = vector.shape_cast %39 : vector<8xf32> to vector<8x1xf32>
      %41 = vector.broadcast %40 : vector<8x1xf32> to vector<8x128xf32>
      %42 = arith.subf %38, %41 : vector<8x128xf32>
      %43 = math.exp %42 : vector<8x128xf32>
      %cst_26 = arith.constant dense<0.000000e+00> : vector<8xf32>
      %44 = vector.multi_reduction <add>, %43, %cst_26 [1] : vector<8x128xf32> to vector<8xf32>
      %45 = vector.shape_cast %44 : vector<8xf32> to vector<8x1xf32>
      %46 = tpu.reciprocal %45 {approx = true} : vector<8x1xf32> -> vector<8x1xf32>
      %47 = vector.broadcast %46 : vector<8x1xf32> to vector<8x128xf32>
      %48 = arith.mulf %43, %47 : vector<8x128xf32>
      %c0_27 = arith.constant 0 : index
      %c0_28 = arith.constant 0 : index
      %49 = vector.load %arg8[%c0_27, %c0_28] : memref<8x128xf32, #tpu.memory_space<vmem>>, vector<8x128xf32>
      tpu.vector_store %arg8[%c0_27, %c0_28], %48 {strides = array<i32>} : memref<8x128xf32, #tpu.memory_space<vmem>>, vector<8x128xf32>,
      %50 = vector.broadcast %40 : vector<8x1xf32> to vector<8x128xf32>
      %51 = arith.subf %38, %50 : vector<8x128xf32>
      %52 = math.log %45 : vector<8x1xf32>
      %53 = vector.broadcast %52 : vector<8x1xf32> to vector<8x128xf32>
      %54 = arith.subf %51, %53 : vector<8x128xf32>
      %c0_29 = arith.constant 0 : index
      %c0_30 = arith.constant 0 : index
      %55 = vector.load %arg7[%c0_29, %c0_30] : memref<8x128xf32, #tpu.memory_space<vmem>>, vector<8x128xf32>
      %56 = arith.mulf %55, %54 : vector<8x128xf32>
      %cst_31 = arith.constant dense<0.000000e+00> : vector<8xf32>
      %57 = vector.multi_reduction <add>, %56, %cst_31 [1] : vector<8x128xf32> to vector<8xf32>
      %58 = vector.shape_cast %57 : vector<8xf32> to vector<8x1xf32>
      %cst_32 = arith.constant 0.000000e+00 : f32
      %59 = vector.broadcast %cst_32 : f32 to vector<8x1xf32>
      %60 = arith.subf %59, %58 : vector<8x1xf32>
      %61 = vector.shape_cast %60 : vector<8x1xf32> to vector<1x8x1xf32>
      %cst_33 = arith.constant dense<0.000000e+00> : vector<1xf32>
      %62 = vector.multi_reduction <add>, %61, %cst_33 [1, 2] : vector<1x8x1xf32> to vector<1xf32>
      %63 = vector.shape_cast %62 : vector<1xf32> to vector<1x1x1xf32>
      %64 = vector.extract %63[0, 0, 0] : f32 from vector<1x1x1xf32>
      %cst_34 = arith.constant 5.000000e-01 : f32
      %65 = arith.mulf %64, %cst_34 : f32
      %66 = vector.broadcast %65 : f32 to vector<8x128xf32>
      %c0_35 = arith.constant 0 : index
      %c0_36 = arith.constant 0 : index
      %67 = vector.load %arg9[%c0_35, %c0_36] : memref<8x128xf32, #tpu.memory_space<vmem>>, vector<8x128xf32>
      tpu.vector_store %arg9[%c0_35, %c0_36], %66 {strides = array<i32>} : memref<8x128xf32, #tpu.memory_space<vmem>>, vector<8x128xf32>,
    } else {
    }
    return
  }
  func.func @transform_0(%arg0: i32, %arg1: i32) -> (i32, i32, i32) {
    %c0_i32 = arith.constant 0 : i32
    %c0_i32_0 = arith.constant 0 : i32
    return %arg0, %arg1, %c0_i32 : i32, i32, i32
  }
  func.func @transform_1(%arg0: i32, %arg1: i32) -> (i32, i32) {
    %c0_i32 = arith.constant 0 : i32
    %c0_i32_0 = arith.constant 0 : i32
    %c0_i32_1 = arith.constant 0 : i32
    return %c0_i32, %c0_i32_0 : i32, i32
  }
  func.func @transform_2(%arg0: i32, %arg1: i32) -> (i32, i32) {
    %c0_i32 = arith.constant 0 : i32
    %c0_i32_0 = arith.constant 0 : i32
    %c0_i32_1 = arith.constant 0 : i32
    return %c0_i32, %c0_i32_0 : i32, i32
  }
  func.func @transform_3(%arg0: i32, %arg1: i32) -> (i32, i32) {
    %c0_i32 = arith.constant 0 : i32
    %c0_i32_0 = arith.constant 0 : i32
    %c0_i32_1 = arith.constant 0 : i32
    return %c0_i32, %c0_i32_0 : i32, i32
  }
  func.func @transform_4(%arg0: i32, %arg1: i32) -> (i32, i32) {
    %c0_i32 = arith.constant 0 : i32
    %c0_i32_0 = arith.constant 0 : i32
    %c0_i32_1 = arith.constant 0 : i32
    return %c0_i32, %c0_i32_0 : i32, i32
  }
  func.func @transform_5(%arg0: i32, %arg1: i32) -> (i32, i32) {
    %c0_i32 = arith.constant 0 : i32
    %c0_i32_0 = arith.constant 0 : i32
    %c0_i32_1 = arith.constant 0 : i32
    return %c0_i32, %c0_i32_0 : i32, i32
  }
  func.func @transform_6(%arg0: i32, %arg1: i32) -> (i32, i32) {
    %c0_i32 = arith.constant 0 : i32
    %c0_i32_0 = arith.constant 0 : i32
    %c0_i32_1 = arith.constant 0 : i32
    return %c0_i32, %c0_i32_0 : i32, i32
  }
  func.func @transform_7(%arg0: i32, %arg1: i32) -> (i32, i32) {
    %c0_i32 = arith.constant 0 : i32
    %c0_i32_0 = arith.constant 0 : i32
    %c0_i32_1 = arith.constant 0 : i32
    return %c0_i32, %c0_i32_0 : i32, i32
  }
}

</mosaic_0001>

<llo_original>
// kernel: tpu_custom_call.1
$region0: #{tpu_custom_call.1}
  #allocation0 [shape = 'u32[]', space=smem, size = 0x4, offset = 0x4, fixed_abs, tag = 'smem constant byte address 0x4 - core index']
  #allocation1 [shape = 'u32[144,128]{1,0:T(1,128)}', space=vmem, size = 0x12000, scoped, tag = 'internal scratch']
  #allocation2 [shape = 'f32[8,128]{1,0:T(8,128)}', space=vmem, size = 0x1000, scoped, tag = 'scratch operand']
  %s0 = inlined_call_operand.hbm [shape: bf16[2,256,128], index: 0, kind: input, shape index: {}]
  %s1 = inlined_call_operand.hbm [shape: bf16[128,128], index: 1, kind: input, shape index: {}]
  %s2 = inlined_call_operand.vmem [shape: f32[1,128], index: 2, kind: input, shape index: {}]
  %s3 = inlined_call_operand.hbm [shape: f32[128,128], index: 3, kind: input, shape index: {}]
  %s4 = inlined_call_operand.vmem [shape: f32[1,128], index: 4, kind: input, shape index: {}]
  %s5 = inlined_call_operand.vmem [shape: f32[8,128], index: 5, kind: input, shape index: {}]
  %s6 = inlined_call_operand.hbm [shape: f32[8,128], index: 6, kind: output, shape index: {0}]
  %s7 = inlined_call_operand.hbm [shape: f32[8,128], index: 7, kind: output, shape index: {1}]
  %8 = xla_tuple %s6, %s7
  %s9 = sld [smem:[#allocation0]]
  $region85: #{tpu_custom_call.1} parent=0
    _
  %s11 = ssub.s32 1, %s9
  %s12 = scalar_select 0, %s11, %s9
  $region1: #{tpu_custom_call.1} parent=0
    #allocation3 [shape = 'u8[65536]{0}', space=vmem, size = 0x10000, scoped, tag = 'input window, operand 0']
    #allocation4 [shape = 's32[2]{0}', space=sflag, size = 0x8, scoped, tag = 'scoped memory for tpu_custom_call.1']
    #allocation5 [shape = 's32[2]{0}', space=sflag, size = 0x8, scoped, tag = 'scoped memory for tpu_custom_call.1']
    #allocation6 [shape = 'u8[32768]{0}', space=vmem, size = 0x8000, scoped, tag = 'input window, operand 1, single buffered']
    #allocation7 [shape = 's32[1]{0}', space=sflag, size = 0x4, scoped, tag = 'scoped memory for tpu_custom_call.1']
    #allocation8 [shape = 'u8[65536]{0}', space=vmem, size = 0x10000, scoped, tag = 'input window, operand 3, single buffered']
    #allocation9 [shape = 'u8[4096]{0}', space=vmem, size = 0x1000, scoped, tag = 'output window, operand 0, single buffered']
    #allocation10 [shape = 'u8[4096]{0}', space=vmem, size = 0x1000, scoped, tag = 'output window, operand 1, single buffered']
    #allocation11 [shape = 's32[1]{0}', space=sflag, size = 0x4, scoped, tag = 'scoped memory for tpu_custom_call.1']
    %13 = vsyncpa [#allocation4], 0
    %s14 = scalar_lea.sflag [#allocation4], 1
    %15 = vsyncpa %s14, 0
    %16 = vsyncpa [#allocation7], 0
    %17 = vsyncpa [#allocation5], 0
    %18 = vsyncpa [#allocation11], 0
    loop: start=0, step=1, limit=6
    $region2: #{tpu_custom_call.1} parent=1 // loop_pre_header
      _
    $region3: #{tpu_custom_call.1} parent=1 // loop_header
      %s20 = sphi 0, %s24
      %p21 = scmp.ge.s32.totalorder %s20, 6
      %s27 = sphi 0, %s39
      %s28 = sphi 0, %s35
      %s29 = sphi 0, %s27
      %s30 = sphi 0, %s28
      %s31 = sphi 0, %s29
      %s32 = sphi 0, %s30
      %s44 = sphi 0, %s46
      %s47 = sphi 0, %s44
      %s48 = sphi 0, %s47
      %s64 = sphi 0, %s48
      %s68 = sphi 0, %s68
      %s70 = sphi 0, %s68
      %s71 = sphi 0, %s70
      %s85 = sphi 0, %s71
      %s89 = sphi 0, %s89
      %s91 = sphi 0, %s89
      %s92 = sphi 0, %s91
      %s106 = sphi 0, %s92
      %s110 = sphi 0, %s110
      %s112 = sphi 0, %s110
      %s113 = sphi 0, %s112
      %s127 = sphi 0, %s113
      %s131 = sphi 0, %s131
      %s133 = sphi 0, %s131
      %s134 = sphi 0, %s133
      %s148 = sphi 0, %s134
      %s152 = sphi 0, %s152
      %s154 = sphi 0, %s152
      %s155 = sphi 0, %s154
      %s169 = sphi 0, %s155
      %s173 = sphi 0, %s173
      %s175 = sphi 0, %s173
      %s176 = sphi 0, %s175
      %s190 = sphi 0, %s176
      %s194 = sphi 0, %s194
      %s196 = sphi 0, %s194
      %s197 = sphi 0, %s196
      %s211 = sphi 0, %s197
    $region4: #{tpu_custom_call.1} parent=1 // loop_header_branch
      %23 = sbr.rel (%p21) target = $region8
    $region5: #{tpu_custom_call.1} parent=1 // loop_body
      %s25 = ssub.s32 %s20, 1
      %s26 = ssub.s32 %s20, 2
      %s33 = sadd.s32 1, %s28
      %p34 = scmp.ge.s32.totalorder %s33, 2
      %s35 = scalar_select %p34, 0, %s33
      %s36 = sadd.s32 1, %s27
      %s37 = scalar_select %p34, %s36, %s27
      %p38 = scmp.ge.s32.totalorder %s37, 2
      %s39 = scalar_select %p38, 0, %s37
      %s40 = ssub.s32 %s27, %s39
      %s41 = ssub.s32 %s28, %s35
      %s42 = sor.u32 %s40, %s41
      %p43 = scmp.eq.s32.totalorder %s42, 0
      %s45 = sadd.s32 %s44, 1
      %s46 = scalar_select %p43, %s44, %s45
      %p49 = pneg %p43
      %p50 = scmp.eq.s32.totalorder %s20, 3
      %p51 = por %p49, %p50
      %p52 = scmp.ne.s32.totalorder %s44, %s47
      %p53 = scmp.eq.s32.totalorder %s20, 0
      %p54 = por %p52, %p53
      %p55 = scmp.ne.s32.totalorder %s44, %s47
      %p56 = scmp.eq.s32.totalorder %s25, 3
      %p57 = por %p55, %p56
      %p58 = scmp.ne.s32.totalorder %s47, %s48
      %p59 = scmp.eq.s32.totalorder %s25, 0
      %p60 = por %p58, %p59
      %p61 = scmp.ne.s32.totalorder %s47, %s48
      %p62 = scmp.eq.s32.totalorder %s26, 3
      %p63 = por %p61, %p62
      %p65 = scmp.ne.s32.totalorder %s48, %s64
      %p66 = scmp.eq.s32.totalorder %s26, 0
      %p67 = por %p65, %p66
      %s69 = sadd.s32 %s68, 1
      %p72 = scmp.eq.s32.totalorder %s20, 3
      %p73 = scmp.ne.s32.totalorder %s68, %s70
      %p74 = scmp.eq.s32.totalorder %s20, 0
      %p75 = por %p73, %p74
      %p76 = scmp.ne.s32.totalorder %s68, %s70
      %p77 = scmp.eq.s32.totalorder %s25, 3
      %p78 = por %p76, %p77
      %p79 = scmp.ne.s32.totalorder %s70, %s71
      %p80 = scmp.eq.s32.totalorder %s25, 0
      %p81 = por %p79, %p80
      %p82 = scmp.ne.s32.totalorder %s70, %s71
      %p83 = scmp.eq.s32.totalorder %s26, 3
      %p84 = por %p82, %p83
      %p86 = scmp.ne.s32.totalorder %s71, %s85
      %p87 = scmp.eq.s32.totalorder %s26, 0
      %p88 = por %p86, %p87
      %s90 = sadd.s32 %s89, 1
      %p93 = scmp.eq.s32.totalorder %s20, 3
      %p94 = scmp.ne.s32.totalorder %s89, %s91
      %p95 = scmp.eq.s32.totalorder %s20, 0
      %p96 = por %p94, %p95
      %p97 = scmp.ne.s32.totalorder %s89, %s91
      %p98 = scmp.eq.s32.totalorder %s25, 3
      %p99 = por %p97, %p98
      %p100 = scmp.ne.s32.totalorder %s91, %s92
      %p101 = scmp.eq.s32.totalorder %s25, 0
      %p102 = por %p100, %p101
      %p103 = scmp.ne.s32.totalorder %s91, %s92
      %p104 = scmp.eq.s32.totalorder %s26, 3
      %p105 = por %p103, %p104
      %p107 = scmp.ne.s32.totalorder %s92, %s106
      %p108 = scmp.eq.s32.totalorder %s26, 0
      %p109 = por %p107, %p108
      %s111 = sadd.s32 %s110, 1
      %p114 = scmp.eq.s32.totalorder %s20, 3
      %p115 = scmp.ne.s32.totalorder %s110, %s112
      %p116 = scmp.eq.s32.totalorder %s20, 0
      %p117 = por %p115, %p116
      %p118 = scmp.ne.s32.totalorder %s110, %s112
      %p119 = scmp.eq.s32.totalorder %s25, 3
      %p120 = por %p118, %p119
      %p121 = scmp.ne.s32.totalorder %s112, %s113
      %p122 = scmp.eq.s32.totalorder %s25, 0
      %p123 = por %p121, %p122
      %p124 = scmp.ne.s32.totalorder %s112, %s113
      %p125 = scmp.eq.s32.totalorder %s26, 3
      %p126 = por %p124, %p125
      %p128 = scmp.ne.s32.totalorder %s113, %s127
      %p129 = scmp.eq.s32.totalorder %s26, 0
      %p130 = por %p128, %p129
      %s132 = sadd.s32 %s131, 1
      %p135 = scmp.eq.s32.totalorder %s20, 3
      %p136 = scmp.ne.s32.totalorder %s131, %s133
      %p137 = scmp.eq.s32.totalorder %s20, 0
      %p138 = por %p136, %p137
      %p139 = scmp.ne.s32.totalorder %s131, %s133
      %p140 = scmp.eq.s32.totalorder %s25, 3
      %p141 = por %p139, %p140
      %p142 = scmp.ne.s32.totalorder %s133, %s134
      %p143 = scmp.eq.s32.totalorder %s25, 0
      %p144 = por %p142, %p143
      %p145 = scmp.ne.s32.totalorder %s133, %s134
      %p146 = scmp.eq.s32.totalorder %s26, 3
      %p147 = por %p145, %p146
      %p149 = scmp.ne.s32.totalorder %s134, %s148
      %p150 = scmp.eq.s32.totalorder %s26, 0
      %p151 = por %p149, %p150
      %s153 = sadd.s32 %s152, 1
      %p156 = scmp.eq.s32.totalorder %s20, 3
      %p157 = scmp.ne.s32.totalorder %s152, %s154
      %p158 = scmp.eq.s32.totalorder %s20, 0
      %p159 = por %p157, %p158
      %p160 = scmp.ne.s32.totalorder %s152, %s154
      %p161 = scmp.eq.s32.totalorder %s25, 3
      %p162 = por %p160, %p161
      %p163 = scmp.ne.s32.totalorder %s154, %s155
      %p164 = scmp.eq.s32.totalorder %s25, 0
      %p165 = por %p163, %p164
      %p166 = scmp.ne.s32.totalorder %s154, %s155
      %p167 = scmp.eq.s32.totalorder %s26, 3
      %p168 = por %p166, %p167
      %p170 = scmp.ne.s32.totalorder %s155, %s169
      %p171 = scmp.eq.s32.totalorder %s26, 0
      %p172 = por %p170, %p171
      %s174 = sadd.s32 %s173, 1
      %p177 = scmp.eq.s32.totalorder %s20, 3
      %p178 = scmp.ne.s32.totalorder %s173, %s175
      %p179 = scmp.eq.s32.totalorder %s20, 0
      %p180 = por %p178, %p179
      %p181 = scmp.ne.s32.totalorder %s173, %s175
      %p182 = scmp.eq.s32.totalorder %s25, 3
      %p183 = por %p181, %p182
      %p184 = scmp.ne.s32.totalorder %s175, %s176
      %p185 = scmp.eq.s32.totalorder %s25, 0
      %p186 = por %p184, %p185
      %p187 = scmp.ne.s32.totalorder %s175, %s176
      %p188 = scmp.eq.s32.totalorder %s26, 3
      %p189 = por %p187, %p188
      %p191 = scmp.ne.s32.totalorder %s176, %s190
      %p192 = scmp.eq.s32.totalorder %s26, 0
      %p193 = por %p191, %p192
      %s195 = sadd.s32 %s194, 1
      %p198 = scmp.eq.s32.totalorder %s20, 3
      %p199 = scmp.ne.s32.totalorder %s194, %s196
      %p200 = scmp.eq.s32.totalorder %s20, 0
      %p201 = por %p199, %p200
      %p202 = scmp.ne.s32.totalorder %s194, %s196
      %p203 = scmp.eq.s32.totalorder %s25, 3
      %p204 = por %p202, %p203
      %p205 = scmp.ne.s32.totalorder %s196, %s197
      %p206 = scmp.eq.s32.totalorder %s25, 0
      %p207 = por %p205, %p206
      %p208 = scmp.ne.s32.totalorder %s196, %s197
      %p209 = scmp.eq.s32.totalorder %s26, 3
      %p210 = por %p208, %p209
      %p212 = scmp.ne.s32.totalorder %s197, %s211
      %p213 = scmp.eq.s32.totalorder %s26, 0
      %p214 = por %p212, %p213
      %p215 = scmp.le.s32.totalorder 1, %s20
      %p216 = scmp.lt.s32.totalorder %s20, 5
      %p217 = pnand %p215, %p216
      %p218 = pneg %p217
      // Predicated region
      $region9: #{tpu_custom_call.1} parent=5 // pred_check
        _
      $region10: #{tpu_custom_call.1} parent=5 // pred_check_branch
        %220 = sbr.rel (%p217) target = $region12
      $region11: #{tpu_custom_call.1} parent=5 // pred_region
        %s221 = ssub.s32 %s20, 1
        // Predicated region
        $region13: #{tpu_custom_call.1} parent=11 // pred_check
          %p222 = pneg %p81
        $region14: #{tpu_custom_call.1} parent=11 // pred_check_branch
          %224 = sbr.rel (%p222) target = $region16
        $region15: #{tpu_custom_call.1} parent=11 // pred_region
          %s226 = ssub.s32 1024, 1024
          %227 = vsyncadd [#allocation7], %s226
          %s228 = sshll.u32 [#allocation6], 4
          %s229 = int_to_ptr.vmem [resolvable:$true] %s228
          %234 = dma.hbm_to_vmem [thread:$0]  %s1, 1024, %s229, [#allocation7], 64, 64, 4
        $region16: #{tpu_custom_call.1} parent=11 // pred_fallthru
          _
        // Predicated region
        $region17: #{tpu_custom_call.1} parent=11 // pred_check
          %p235 = pneg %p102
        $region18: #{tpu_custom_call.1} parent=11 // pred_check_branch
          %237 = sbr.rel (%p235) target = $region20
        $region19: #{tpu_custom_call.1} parent=11 // pred_region
          _
        $region20: #{tpu_custom_call.1} parent=11 // pred_fallthru
          _
        // Predicated region
        $region21: #{tpu_custom_call.1} parent=11 // pred_check
          %p238 = pneg %p123
        $region22: #{tpu_custom_call.1} parent=11 // pred_check_branch
          %240 = sbr.rel (%p238) target = $region24
        $region23: #{tpu_custom_call.1} parent=11 // pred_region
          %s242 = ssub.s32 2048, 2048
          %243 = vsyncadd [#allocation7], %s242
          %s244 = sshll.u32 [#allocation8], 4
          %s245 = int_to_ptr.vmem [resolvable:$true] %s244
          %250 = dma.hbm_to_vmem [thread:$0]  %s3, 2048, %s245, [#allocation7], 128, 128, 8
        $region24: #{tpu_custom_call.1} parent=11 // pred_fallthru
          _
        // Predicated region
        $region25: #{tpu_custom_call.1} parent=11 // pred_check
          %p251 = pneg %p144
        $region26: #{tpu_custom_call.1} parent=11 // pred_check_branch
          %253 = sbr.rel (%p251) target = $region28
        $region27: #{tpu_custom_call.1} parent=11 // pred_region
          _
        $region28: #{tpu_custom_call.1} parent=11 // pred_fallthru
          _
        // Predicated region
        $region29: #{tpu_custom_call.1} parent=11 // pred_check
          %p254 = pneg %p165
        $region30: #{tpu_custom_call.1} parent=11 // pred_check_branch
          %256 = sbr.rel (%p254) target = $region32
        $region31: #{tpu_custom_call.1} parent=11 // pred_region
          _
        $region32: #{tpu_custom_call.1} parent=11 // pred_fallthru
          _
      $region12: #{tpu_custom_call.1} parent=5 // pred_fallthru
        _
      %p257 = scmp.lt.s32.totalorder %s20, 4
      // Predicated region
      $region33: #{tpu_custom_call.1} parent=5 // pred_check
        %p258 = pneg %p257
      $region34: #{tpu_custom_call.1} parent=5 // pred_check_branch
        %260 = sbr.rel (%p258) target = $region36
      $region35: #{tpu_custom_call.1} parent=5 // pred_region
        // Predicated region
        $region37: #{tpu_custom_call.1} parent=35 // pred_check
          %p261 = pneg %p54
        $region38: #{tpu_custom_call.1} parent=35 // pred_check_branch
          %263 = sbr.rel (%p261) target = $region40
        $region39: #{tpu_custom_call.1} parent=35 // pred_region
          %s264 = sand.u32 %s44, 1
          %s265 = scalar_lea.sflag [#allocation4], %s264
          %s266 = sand.u32 %s44, 1
          %s267 = smul.addr %s266, 64
          %s268 = scalar_lea.vmem [#allocation3], %s267
          %s269 = smul.u32 16, %s28
          %s271 = ssub.s32 1024, 1024
          %272 = vsyncadd %s265, %s271
          %s273 = smul.addr %s27, 32
          %s274 = sadd.s32 %s269, %s273
          %s275 = smul.addr %s274, 64
          %s276 = scalar_lea.hbm %s0, %s275
          %s277 = sshll.u32 %s268, 4
          %s278 = int_to_ptr.vmem [resolvable:$true] %s277
          %283 = dma.hbm_to_vmem [thread:$0]  %s276, 1024, %s278, %s265, 64, 64, 4
        $region40: #{tpu_custom_call.1} parent=35 // pred_fallthru
          _
      $region36: #{tpu_custom_call.1} parent=5 // pred_fallthru
        _
      %p284 = scmp.le.s32.totalorder 1, %s20
      %p285 = scmp.lt.s32.totalorder %s20, 5
      %p286 = pnand %p284, %p285
      %p287 = pneg %p286
      // Predicated region
      $region41: #{tpu_custom_call.1} parent=5 // pred_check
        _
      $region42: #{tpu_custom_call.1} parent=5 // pred_check_branch
        %289 = sbr.rel (%p286) target = $region44
      $region43: #{tpu_custom_call.1} parent=5 // pred_region
        %s290 = ssub.s32 %s20, 1
        %s291 = sand.u32 %s47, 1
        %s292 = scalar_lea.sflag [#allocation4], %s291
        %s293 = sand.u32 %s47, 1
        %s294 = smul.addr %s293, 64
        %s295 = scalar_lea.vmem [#allocation3], %s294
        // Predicated region
        $region45: #{tpu_custom_call.1} parent=43 // pred_check
          %p296 = pneg %p60
        $region46: #{tpu_custom_call.1} parent=43 // pred_check_branch
          %298 = sbr.rel (%p296) target = $region48
        $region47: #{tpu_custom_call.1} parent=43 // pred_region
          %299 = dma.done %s292, 1024
        $region48: #{tpu_custom_call.1} parent=43 // pred_fallthru
          _
        // Predicated region
        $region49: #{tpu_custom_call.1} parent=43 // pred_check
          %p300 = pneg %p81
        $region50: #{tpu_custom_call.1} parent=43 // pred_check_branch
          %302 = sbr.rel (%p300) target = $region52
        $region51: #{tpu_custom_call.1} parent=43 // pred_region
          %303 = dma.done [#allocation7], 1024
        $region52: #{tpu_custom_call.1} parent=43 // pred_fallthru
          _
        // Predicated region
        $region53: #{tpu_custom_call.1} parent=43 // pred_check
          %p304 = pneg %p123
        $region54: #{tpu_custom_call.1} parent=43 // pred_check_branch
          %306 = sbr.rel (%p304) target = $region56
        $region55: #{tpu_custom_call.1} parent=43 // pred_region
          %307 = dma.done [#allocation7], 2048
        $region56: #{tpu_custom_call.1} parent=43 // pred_fallthru
          _
        %s308 = sand.u32 %s47, 1
        %s309 = scalar_lea.sflag [#allocation4], %s308
        %s310 = sand.u32 %s47, 1
        %s311 = smul.addr %s310, 64
        %s312 = scalar_lea.vmem [#allocation3], %s311
        %p313 = pneg %p60
        %p314 = pneg %p57
        %p315 = pneg %p81
        %p316 = pneg %p78
        %p317 = pneg %p102
        %p318 = pneg %p99
        %p319 = pneg %p123
        %p320 = pneg %p120
        %p321 = pneg %p144
        %p322 = pneg %p141
        %p323 = pneg %p165
        %p324 = pneg %p162
        %p325 = pneg %p186
        %p326 = pneg %p183
        %p327 = pneg %p207
        %p328 = pneg %p204
        %s329 = smul.u32 16, %s30
        %p331 = scmp.eq.s32.totalorder %s29, 0
        %p332 = scmp.eq.s32.totalorder %s30, 0
        %p333 = pnand %p331, %p332
        %p334 = pneg %p333
        // Predicated region
        $region57: #{tpu_custom_call.1} parent=43 // pred_check
          _
        $region58: #{tpu_custom_call.1} parent=43 // pred_check_branch
          %336 = sbr.rel (%p333) target = $region60
        $region59: #{tpu_custom_call.1} parent=43 // pred_region
          %337 = vst [vmem:[#allocation2] sm:$0xff] 0.0
        $region60: #{tpu_custom_call.1} parent=43 // pred_fallthru
          _
        %v338 = vld [vmem:[%s295] sm:$0xf]
        %v339 = vld [vmem:[%s295 + $0x4] sm:$0xf]
        %v340 = vld [vmem:[%s295 + $0x8] sm:$0xf]
        %v341 = vld [vmem:[%s295 + $0xc] sm:$0xf]
        %v342 = vld [vmem:[%s295 + $0x10] sm:$0xf]
        %v343 = vld [vmem:[%s295 + $0x14] sm:$0xf]
        %v344 = vld [vmem:[%s295 + $0x18] sm:$0xf]
        %v345 = vld [vmem:[%s295 + $0x1c] sm:$0xf]
        %v346 = vld [vmem:[%s295 + $0x20] sm:$0xf]
        %v347 = vld [vmem:[%s295 + $0x24] sm:$0xf]
        %v348 = vld [vmem:[%s295 + $0x28] sm:$0xf]
        %v349 = vld [vmem:[%s295 + $0x2c] sm:$0xf]
        %v350 = vld [vmem:[%s295 + $0x30] sm:$0xf]
        %v351 = vld [vmem:[%s295 + $0x34] sm:$0xf]
        %v352 = vld [vmem:[%s295 + $0x38] sm:$0xf]
        %v353 = vld [vmem:[%s295 + $0x3c] sm:$0xf]
        %v354 = vld [vmem:[#allocation6] sm:$0xf]
        %v355 = vld [vmem:[#allocation6 + $0x4] sm:$0xf]
        %v356 = vld [vmem:[#allocation6 + $0x8] sm:$0xf]
        %v357 = vld [vmem:[#allocation6 + $0xc] sm:$0xf]
        %v358 = vld [vmem:[#allocation6 + $0x10] sm:$0xf]
        %v359 = vld [vmem:[#allocation6 + $0x14] sm:$0xf]
        %v360 = vld [vmem:[#allocation6 + $0x18] sm:$0xf]
        %v361 = vld [vmem:[#allocation6 + $0x1c] sm:$0xf]
        %v362 = vld [vmem:[#allocation6 + $0x20] sm:$0xf]
        %v363 = vld [vmem:[#allocation6 + $0x24] sm:$0xf]
        %v364 = vld [vmem:[#allocation6 + $0x28] sm:$0xf]
        %v365 = vld [vmem:[#allocation6 + $0x2c] sm:$0xf]
        %v366 = vld [vmem:[#allocation6 + $0x30] sm:$0xf]
        %v367 = vld [vmem:[#allocation6 + $0x34] sm:$0xf]
        %v368 = vld [vmem:[#allocation6 + $0x38] sm:$0xf]
        %v369 = vld [vmem:[#allocation6 + $0x3c] sm:$0xf]
        %v370 = vld [vmem:[%s2] sm:$0x1]
        %v372 = vlaneseq
        %v373 = vshrl.u32 %v372, 7
        %v374 = vsub.s32 0, %v373
        %v375 = vrot.slane %v370, %v374
        %v393 = vunpack.c.l.b16 %v338
        %v394 = vunpack.c.l.b16 %v339
        %v395 = vunpack.c.l.b16 %v340
        %v396 = vunpack.c.l.b16 %v341
        %v397 = vunpack.c.l.b16 %v342
        %v398 = vunpack.c.l.b16 %v343
        %v399 = vunpack.c.l.b16 %v344
        %v400 = vunpack.c.l.b16 %v345
        %v401 = vunpack.c.l.b16 %v346
        %v402 = vunpack.c.l.b16 %v347
        %v403 = vunpack.c.l.b16 %v348
        %v404 = vunpack.c.l.b16 %v349
        %v405 = vunpack.c.l.b16 %v350
        %v406 = vunpack.c.l.b16 %v351
        %v407 = vunpack.c.l.b16 %v352
        %v408 = vunpack.c.l.b16 %v353
        %v409 = vpack.c.b16 %v394, %v393
        %v410 = vpack.c.b16 %v396, %v395
        %v411 = vpack.c.b16 %v398, %v397
        %v412 = vpack.c.b16 %v400, %v399
        %v413 = vpack.c.b16 %v402, %v401
        %v414 = vpack.c.b16 %v404, %v403
        %v415 = vpack.c.b16 %v406, %v405
        %v416 = vpack.c.b16 %v408, %v407
        %v441 = vunpack.c.l.b16 %v354
        %v442 = vunpack.c.l.b16 %v355
        %v443 = vunpack.c.l.b16 %v356
        %v444 = vunpack.c.l.b16 %v357
        %v445 = vunpack.c.l.b16 %v358
        %v446 = vunpack.c.l.b16 %v359
        %v447 = vunpack.c.l.b16 %v360
        %v448 = vunpack.c.l.b16 %v361
        %v449 = vunpack.c.l.b16 %v362
        %v450 = vunpack.c.l.b16 %v363
        %v451 = vunpack.c.l.b16 %v364
        %v452 = vunpack.c.l.b16 %v365
        %v453 = vunpack.c.l.b16 %v366
        %v454 = vunpack.c.l.b16 %v367
        %v455 = vunpack.c.l.b16 %v368
        %v456 = vunpack.c.l.b16 %v369
        %v457 = vpack.c.b16 %v442, %v441
        %v458 = vpack.c.b16 %v444, %v443
        %v459 = vpack.c.b16 %v446, %v445
        %v460 = vpack.c.b16 %v448, %v447
        %v461 = vpack.c.b16 %v450, %v449
        %v462 = vpack.c.b16 %v452, %v451
        %v463 = vpack.c.b16 %v454, %v453
        %v464 = vpack.c.b16 %v456, %v455
        %473 = vmatprep.subr.bf16.mxu0 0
        %474 = vmatpush1.bf16.msra.mxu0 %v457
        %475 = vmatprep.subr.bf16.mxu0 0
        %476 = vmatpush1.bf16.msra.mxu0 %v458
        %477 = vmatprep.subr.bf16.mxu0 0
        %478 = vmatpush1.bf16.msra.mxu0 %v459
        %479 = vmatprep.subr.bf16.mxu0 0
        %480 = vmatpush1.bf16.msra.mxu0 %v460
        %481 = vmatprep.subr.bf16.mxu0 0
        %482 = vmatpush1.bf16.msra.mxu0 %v461
        %483 = vmatprep.subr.bf16.mxu0 0
        %484 = vmatpush1.bf16.msra.mxu0 %v462
        %485 = vmatprep.subr.bf16.mxu0 0
        %486 = vmatpush1.bf16.msra.mxu0 %v463
        %487 = vmatprep.subr.bf16.mxu0 0
        %488 = vmatpush1.bf16.msra.mxu0 %v464
        %489 = vmatprep.subr.bf16.mxu0 0
        %490 = vmatpush1.bf16.msra.mxu0 0
        %491 = vmatprep.subr.bf16.mxu0 0
        %492 = vmatpush1.bf16.msra.mxu0 0
        %493 = vmatprep.subr.bf16.mxu0 0
        %494 = vmatpush1.bf16.msra.mxu0 0
        %495 = vmatprep.subr.bf16.mxu0 0
        %496 = vmatpush1.bf16.msra.mxu0 0
        %497 = vmatprep.subr.bf16.mxu0 0
        %498 = vmatpush1.bf16.msra.mxu0 0
        %499 = vmatprep.subr.bf16.mxu0 0
        %500 = vmatpush1.bf16.msra.mxu0 0
        %501 = vmatprep.subr.bf16.mxu0 0
        %502 = vmatpush1.bf16.msra.mxu0 0
        %503 = vmatprep.subr.bf16.mxu0 0
        %504 = vmatpush1.bf16.msra.mxu0 0
        %505 = vmatprep.mubr.bf16.mxu0 0
        %506 = vmatmul.mubr.bf16.gmra.mrb[0].mxu0 %v409
        %v507 = vpop.f32.mrb[0].mxu0
        %v508 = vadd.f32 %v375, %v507
        %v509 = vpop.f32.mrb[0].mxu0
        %v510 = vpop.f32.mrb[0].mxu0
        %v511 = vadd.f32 %v375, %v510
        %v512 = vpop.f32.mrb[0].mxu0
        %513 = vmatprep.mubr.bf16.mxu0 0
        %514 = vmatmul.mubr.bf16.gmra.mrb[0].mxu0 %v410
        %v515 = vpop.f32.mrb[0].mxu0
        %v516 = vadd.f32 %v375, %v515
        %v517 = vpop.f32.mrb[0].mxu0
        %v518 = vpop.f32.mrb[0].mxu0
        %v519 = vadd.f32 %v375, %v518
        %v520 = vpop.f32.mrb[0].mxu0
        %521 = vmatprep.mubr.bf16.mxu0 0
        %522 = vmatmul.mubr.bf16.gmra.mrb[0].mxu0 %v411
        %v523 = vpop.f32.mrb[0].mxu0
        %v524 = vadd.f32 %v375, %v523
        %v525 = vpop.f32.mrb[0].mxu0
        %v526 = vpop.f32.mrb[0].mxu0
        %v527 = vadd.f32 %v375, %v526
        %v528 = vpop.f32.mrb[0].mxu0
        %529 = vmatprep.mubr.bf16.mxu0 0
        %530 = vmatmul.mubr.bf16.gmra.mrb[0].mxu0 %v412
        %v531 = vpop.f32.mrb[0].mxu0
        %v532 = vadd.f32 %v375, %v531
        %v533 = vpop.f32.mrb[0].mxu0
        %v534 = vpop.f32.mrb[0].mxu0
        %v535 = vadd.f32 %v375, %v534
        %v536 = vpop.f32.mrb[0].mxu0
        %537 = vmatprep.mubr.bf16.mxu0 0
        %538 = vmatmul.mubr.bf16.gmra.mrb[0].mxu0 %v413
        %v539 = vpop.f32.mrb[0].mxu0
        %v540 = vadd.f32 %v375, %v539
        %v541 = vpop.f32.mrb[0].mxu0
        %v542 = vpop.f32.mrb[0].mxu0
        %v543 = vadd.f32 %v375, %v542
        %v544 = vpop.f32.mrb[0].mxu0
        %545 = vmatprep.mubr.bf16.mxu0 0
        %546 = vmatmul.mubr.bf16.gmra.mrb[0].mxu0 %v414
        %v547 = vpop.f32.mrb[0].mxu0
        %v548 = vadd.f32 %v375, %v547
        %v549 = vpop.f32.mrb[0].mxu0
        %v550 = vpop.f32.mrb[0].mxu0
        %v551 = vadd.f32 %v375, %v550
        %v552 = vpop.f32.mrb[0].mxu0
        %553 = vmatprep.mubr.bf16.mxu0 0
        %554 = vmatmul.mubr.bf16.gmra.mrb[0].mxu0 %v415
        %v555 = vpop.f32.mrb[0].mxu0
        %v556 = vadd.f32 %v375, %v555
        %v557 = vpop.f32.mrb[0].mxu0
        %v558 = vpop.f32.mrb[0].mxu0
        %v559 = vadd.f32 %v375, %v558
        %v560 = vpop.f32.mrb[0].mxu0
        %561 = vmatprep.mubr.bf16.mxu0 0
        %562 = vmatmul.mubr.bf16.gmra.mrb[0].mxu0 %v416
        %v563 = vpop.f32.mrb[0].mxu0
        %v564 = vadd.f32 %v375, %v563
        %v565 = vpop.f32.mrb[0].mxu0
        %v566 = vpop.f32.mrb[0].mxu0
        %v567 = vadd.f32 %v375, %v566
        %v568 = vpop.f32.mrb[0].mxu0
        %569 = vdwg.mxu0
        %v570 = vmax.f32 %v508, 0.0
        %v571 = vmax.f32 %v511, 0.0
        %v572 = vmax.f32 %v516, 0.0
        %v573 = vmax.f32 %v519, 0.0
        %v574 = vmax.f32 %v524, 0.0
        %v575 = vmax.f32 %v527, 0.0
        %v576 = vmax.f32 %v532, 0.0
        %v577 = vmax.f32 %v535, 0.0
        %v578 = vmax.f32 %v540, 0.0
        %v579 = vmax.f32 %v543, 0.0
        %v580 = vmax.f32 %v548, 0.0
        %v581 = vmax.f32 %v551, 0.0
        %v582 = vmax.f32 %v556, 0.0
        %v583 = vmax.f32 %v559, 0.0
        %v584 = vmax.f32 %v564, 0.0
        %v585 = vmax.f32 %v567, 0.0
        %v586 = vadd.f32 %v570, %v571
        %v587 = vadd.f32 %v586, %v572
        %v588 = vadd.f32 %v587, %v573
        %v589 = vadd.f32 %v588, %v574
        %v590 = vadd.f32 %v589, %v575
        %v591 = vadd.f32 %v590, %v576
        %v592 = vadd.f32 %v591, %v577
        %v593 = vadd.f32 %v592, %v578
        %v594 = vadd.f32 %v593, %v579
        %v595 = vadd.f32 %v594, %v580
        %v596 = vadd.f32 %v595, %v581
        %v597 = vadd.f32 %v596, %v582
        %v598 = vadd.f32 %v597, %v583
        %v599 = vadd.f32 %v598, %v584
        %v600 = vadd.f32 %v599, %v585
        %v601 = vrot.slane %v600, 4
        %v602 = vadd.f32 %v600, %v601
        %v603 = vrot.slane %v602, 2
        %v604 = vadd.f32 %v602, %v603
        %v605 = vrot.slane %v604, 1
        %v606 = vadd.f32 %v604, %v605
        %v607 = vmul.f32 %v606, 0.00390625
        %v608 = vlaneseq
        %v609 = vshrl.u32 %v608, 7
        %v610 = vld [vmem:[#allocation2] sm:$0xff]
        %v611 = vstv %s29
        %vm612 = vcmp.eq.s32.totalorder %v609, %v611
        %v613 = vsel %vm612, %v607, 0.0
        %v614 = vadd.f32 %v610, %v613
        %615 = vst [vmem:[#allocation2] sm:$0xff] %v614
        %p616 = scmp.eq.s32.totalorder %s29, 1
        %p617 = scmp.eq.s32.totalorder %s30, 1
        %p618 = pnand %p616, %p617
        %p619 = pneg %p618
        // Predicated region
        $region61: #{tpu_custom_call.1} parent=43 // pred_check
          _
        $region62: #{tpu_custom_call.1} parent=43 // pred_check_branch
          %621 = sbr.rel (%p618) target = $region64
        $region63: #{tpu_custom_call.1} parent=43 // pred_region
          %v622 = vld [vmem:[#allocation2] sm:$0xff]
          %v623 = vld [vmem:[#allocation8] sm:$0xff]
          %v624 = vld [vmem:[#allocation8 + $0x8] sm:$0xff]
          %v625 = vld [vmem:[#allocation8 + $0x10] sm:$0xff]
          %v626 = vld [vmem:[#allocation8 + $0x18] sm:$0xff]
          %v627 = vld [vmem:[#allocation8 + $0x20] sm:$0xff]
          %v628 = vld [vmem:[#allocation8 + $0x28] sm:$0xff]
          %v629 = vld [vmem:[#allocation8 + $0x30] sm:$0xff]
          %v630 = vld [vmem:[#allocation8 + $0x38] sm:$0xff]
          %v631 = vld [vmem:[#allocation8 + $0x40] sm:$0xff]
          %v632 = vld [vmem:[#allocation8 + $0x48] sm:$0xff]
          %v633 = vld [vmem:[#allocation8 + $0x50] sm:$0xff]
          %v634 = vld [vmem:[#allocation8 + $0x58] sm:$0xff]
          %v635 = vld [vmem:[#allocation8 + $0x60] sm:$0xff]
          %v636 = vld [vmem:[#allocation8 + $0x68] sm:$0xff]
          %v637 = vld [vmem:[#allocation8 + $0x70] sm:$0xff]
          %v638 = vld [vmem:[#allocation8 + $0x78] sm:$0xff]
          %v639 = vld [vmem:[%s4] sm:$0x1]
          %v641 = vlaneseq
          %v642 = vshrl.u32 %v641, 7
          %v643 = vsub.s32 0, %v642
          %v644 = vrot.slane %v639, %v643
          %646 = vmatprep.subr.mxu0 0.0
          %647 = vmatpush1.msra.mxu0 %v623
          %648 = vmatprep.subr.mxu0 0.0
          %649 = vmatpush1.msra.mxu0 %v624
          %650 = vmatprep.subr.mxu0 0.0
          %651 = vmatpush1.msra.mxu0 %v625
          %652 = vmatprep.subr.mxu0 0.0
          %653 = vmatpush1.msra.mxu0 %v626
          %654 = vmatprep.subr.mxu0 0.0
          %655 = vmatpush1.msra.mxu0 %v627
          %656 = vmatprep.subr.mxu0 0.0
          %657 = vmatpush1.msra.mxu0 %v628
          %658 = vmatprep.subr.mxu0 0.0
          %659 = vmatpush1.msra.mxu0 %v629
          %660 = vmatprep.subr.mxu0 0.0
          %661 = vmatpush1.msra.mxu0 %v630
          %662 = vmatprep.subr.mxu0 0.0
          %663 = vmatpush1.msra.mxu0 %v631
          %664 = vmatprep.subr.mxu0 0.0
          %665 = vmatpush1.msra.mxu0 %v632
          %666 = vmatprep.subr.mxu0 0.0
          %667 = vmatpush1.msra.mxu0 %v633
          %668 = vmatprep.subr.mxu0 0.0
          %669 = vmatpush1.msra.mxu0 %v634
          %670 = vmatprep.subr.mxu0 0.0
          %671 = vmatpush1.msra.mxu0 %v635
          %672 = vmatprep.subr.mxu0 0.0
          %673 = vmatpush1.msra.mxu0 %v636
          %674 = vmatprep.subr.mxu0 0.0
          %675 = vmatpush1.msra.mxu0 %v637
          %676 = vmatprep.subr.mxu0 0.0
          %677 = vmatpush1.msra.mxu0 %v638
          %678 = vmatprep.subr.mxu0 0.0
          %679 = vmatpush1.msra.mxu0 0.0
          %680 = vmatprep.subr.mxu0 0.0
          %681 = vmatpush1.msra.mxu0 0.0
          %682 = vmatprep.subr.mxu0 0.0
          %683 = vmatpush1.msra.mxu0 0.0
          %684 = vmatprep.subr.mxu0 0.0
          %685 = vmatpush1.msra.mxu0 0.0
          %686 = vmatprep.subr.mxu0 0.0
          %687 = vmatpush1.msra.mxu0 0.0
          %688 = vmatprep.subr.mxu0 0.0
          %689 = vmatpush1.msra.mxu0 0.0
          %690 = vmatprep.subr.mxu0 0.0
          %691 = vmatpush1.msra.mxu0 0.0
          %692 = vmatprep.subr.mxu0 0.0
          %693 = vmatpush1.msra.mxu0 0.0
          %694 = vmatprep.subr.mxu0 0.0
          %695 = vmatpush1.msra.mxu0 0.0
          %696 = vmatprep.subr.mxu0 0.0
          %697 = vmatpush1.msra.mxu0 0.0
          %698 = vmatprep.subr.mxu0 0.0
          %699 = vmatpush1.msra.mxu0 0.0
          %700 = vmatprep.subr.mxu0 0.0
          %701 = vmatpush1.msra.mxu0 0.0
          %702 = vmatprep.subr.mxu0 0.0
          %703 = vmatpush1.msra.mxu0 0.0
          %704 = vmatprep.subr.mxu0 0.0
          %705 = vmatpush1.msra.mxu0 0.0
          %706 = vmatprep.subr.mxu0 0.0
          %707 = vmatpush1.msra.mxu0 0.0
          %708 = vmatprep.subr.mxu0 0.0
          %709 = vmatpush1.msra.mxu0 0.0
          %710 = vmatprep.mubr.f32.mxu0 0.0
          %711 = vmatmul.mubr.f32.gmra.mrb[0].mxu0 %v622
          %v712 = vpop.f32.mrb[0].mxu0
          %v713 = vadd.f32 %v644, %v712
          %v714 = vpop.f32.mrb[0].mxu0
          %715 = vdwg.mxu0
          %716 = vmax.xlane.f32.xlu0 %v713
          %v717 = vpop.xlane.xlu0 %716
          %v718 = vsub.f32 %v713, %v717
          %v719 = vmul.f32 %v718, 1.442695
          %v720 = vpow.pop %v719
          %721 = vadd.xlane.f32.xlu0 %v720
          %v722 = vpop.xlane.xlu0 %721
          %v723 = vrcp.pop %v722
          %v724 = vmul.f32 %v720, %v723
          %725 = vst [vmem:[#allocation9] sm:$0xff] %v724
          %v726 = vlog2.pop %v722
          %v727 = vmul.f32 %v726, 0.6931472
          %v728 = vsub.f32 %v718, %v727
          %v729 = vld [vmem:[%s5] sm:$0xff]
          %v730 = vmul.f32 %v729, %v728
          %731 = vadd.xlane.f32.xlu0 %v730
          %v732 = vpop.xlane.xlu0 %731
          %v733 = vsub.f32 0.0, %v732
          %vm734 = vcmask 7168
          %v735 = vsel %vm734, %v733, 0.0
          %736 = vadd.xlane.f32.xlu0 %v735
          %v737 = vpop.xlane.xlu0 %736
          %v738 = vrot.slane %v737, 4
          %v739 = vadd.f32 %v737, %v738
          %v740 = vrot.slane %v739, 2
          %v741 = vadd.f32 %v739, %v740
          %v742 = vrot.slane %v741, 1
          %v743 = vadd.f32 %v741, %v742
          %s744 = vtos %v743
          %s745 = smul.f32 %s744, 0.5
          %v746 = vstv %s745
          %747 = vst [vmem:[#allocation10] sm:$0xff] %v746
        $region64: #{tpu_custom_call.1} parent=43 // pred_fallthru
          _
        // Predicated region
        $region65: #{tpu_custom_call.1} parent=43 // pred_check
          %p748 = pneg %p183
        $region66: #{tpu_custom_call.1} parent=43 // pred_check_branch
          %750 = sbr.rel (%p748) target = $region68
        $region67: #{tpu_custom_call.1} parent=43 // pred_region
          %s752 = ssub.s32 128, 128
          %753 = vsyncadd [#allocation5], %s752
          %s755 = sshll.u32 [#allocation9], 4
          %s756 = int_to_ptr.vmem [resolvable:$true] %s755
          %758 = dma.vmem_to_hbm [thread:$0]  %s756, 128, %s6, [#allocation5]
        $region68: #{tpu_custom_call.1} parent=43 // pred_fallthru
          _
        // Predicated region
        $region69: #{tpu_custom_call.1} parent=43 // pred_check
          %p759 = pneg %p204
        $region70: #{tpu_custom_call.1} parent=43 // pred_check_branch
          %761 = sbr.rel (%p759) target = $region72
        $region71: #{tpu_custom_call.1} parent=43 // pred_region
          %s763 = ssub.s32 128, 128
          %764 = vsyncadd [#allocation11], %s763
          %s766 = sshll.u32 [#allocation10], 4
          %s767 = int_to_ptr.vmem [resolvable:$true] %s766
          %769 = dma.vmem_to_hbm [thread:$0]  %s767, 128, %s7, [#allocation11]
        $region72: #{tpu_custom_call.1} parent=43 // pred_fallthru
          _
        // Predicated region
        $region73: #{tpu_custom_call.1} parent=43 // pred_check
          %p770 = pneg %p183
        $region74: #{tpu_custom_call.1} parent=43 // pred_check_branch
          %772 = sbr.rel (%p770) target = $region76
        $region75: #{tpu_custom_call.1} parent=43 // pred_region
          %773 = dma.done [#allocation5], 128
        $region76: #{tpu_custom_call.1} parent=43 // pred_fallthru
          _
        // Predicated region
        $region77: #{tpu_custom_call.1} parent=43 // pred_check
          %p774 = pneg %p204
        $region78: #{tpu_custom_call.1} parent=43 // pred_check_branch
          %776 = sbr.rel (%p774) target = $region80
        $region79: #{tpu_custom_call.1} parent=43 // pred_region
          %777 = dma.done [#allocation11], 128
        $region80: #{tpu_custom_call.1} parent=43 // pred_fallthru
          _
      $region44: #{tpu_custom_call.1} parent=5 // pred_fallthru
        _
      %p778 = scmp.le.s32.totalorder 2, %s20
      // Predicated region
      $region81: #{tpu_custom_call.1} parent=5 // pred_check
        %p779 = pneg %p778
      $region82: #{tpu_custom_call.1} parent=5 // pred_check_branch
        %781 = sbr.rel (%p779) target = $region84
      $region83: #{tpu_custom_call.1} parent=5 // pred_region
        %s782 = ssub.s32 %s20, 2
      $region84: #{tpu_custom_call.1} parent=5 // pred_fallthru
        _
    $region6: #{tpu_custom_call.1} parent=1 // loop_footer
      %s24 = sadd.s32 1, %s20
    $region7: #{tpu_custom_call.1} parent=1 // loop_footer_branch
      %19 = sbr.rel target = $region3
    $region8: #{tpu_custom_call.1} parent=1 // loop_exit
      _
    %783 = vsyncpa [#allocation4], 1
    %s784 = scalar_lea.sflag [#allocation4], 1
    %785 = vsyncpa %s784, 1
    %786 = vsyncpa [#allocation7], 1
    %787 = vsyncpa [#allocation5], 1
    %s788 = scalar_lea.sflag [#allocation5], 1
    %789 = vsyncpa %s788, 1
    %790 = vsyncpa [#allocation11], 1

</llo_original>
